<compile_context>
chip_gen: v7x
topology: tpu7x:2x2x1
jax: 0.10.0
libtpu: 0.0.40
codegen_flags: <defaults>
</compile_context>

<pallas_src>
import functools

import jax
import jax.numpy as jnp
import numpy as np
from jax.experimental import pallas as pl
from jax.experimental.pallas import tpu as pltpu


# Off-centre depthwise taps, shared between wrapper (mask construction) and kernel.
_TAPS = tuple((dh, dw) for dh in (-1, 0, 1) for dw in (-1, 0, 1) if (dh, dw) != (0, 0))


# ----------------------------------------------------------------------------
# Pallas kernel: NB images per grid step, all three convs fused, flat spatial.
# ----------------------------------------------------------------------------
def _linear_bottleneck_kernel(x_ref, p1_ref, p3_ref, masks_ref, *rest,
                              H, W, Cin, Ce, Cout, NB, stride, add_residual):
    if stride > 1:
        sel_ref, o_ref = rest
    else:
        (o_ref,) = rest
    HW = H * W

    # Unpack the consolidated parameter blocks (all f32, tiny lane slices).
    p1 = p1_ref[...]
    w1 = p1[:, 0:Cin]                      # (Ce, Cin)   conv1 weight (bn1 folded)
    b1 = p1[:, Cin:Cin + 1]                # (Ce, 1)
    wd = p1[:, Cin + 1:Cin + 10]           # (Ce, 9)     depthwise 3x3 (bn2 folded)
    bd = p1[:, Cin + 10:Cin + 11]          # (Ce, 1)
    p3 = p3_ref[...]
    w3 = p3[:, 0:Ce]                       # (Cout, Ce)  conv3 weight (bn3 folded)
    b3 = p3[:, Ce:Ce + 1]                  # (Cout, 1)
    masks = masks_ref[...]                 # (8, HW) f32 0/1 border validity per tap

    # Static unroll over the images of this grid step: keeps every tensor a simple
    # lane-dense 2-D (C, HW) map and gives the scheduler cross-image ILP
    # (image i's VPU depthwise can overlap image i+1's MXU conv3).
    for nb in range(NB):
        x = x_ref[nb]                                          # (Cin, HW) f32

        # ---- conv1 (1x1) + folded bn1: Cin broadcast FMAs on the VPU, f32 ----
        # K = Cin is tiny; a matmul would use <Cin/256 of the MXU contraction
        # width and put its push/pop latency on the critical path.
        h = w1[:, 0:1] * x[0:1, :]
        for c in range(1, Cin):
            h = h + w1[:, c:c + 1] * x[c:c + 1, :]
        h = h + b1                                             # (Ce, HW) f32

        # ---- depthwise 3x3 (pad=1) + folded bn2 + ReLU6 on the VPU ----
        # Off-centre taps are lane rotations of the flat map; positions whose
        # rotated read would wrap around or cross an image row are exactly the
        # image-border positions, which the precomputed masks zero out.
        # (Depthwise stays f32: v5e has no bf16 VALU; bf16 taps on v6e/v7x would
        #  roughly halve the VALU work here if ever needed.)
        acc = h * wd[:, 4:5]                                   # centre tap (0, 0)
        for t, (dh, dw) in enumerate(_TAPS):
            off = dh * W + dw
            k = (dh + 1) * 3 + (dw + 1)
            tap = pltpu.roll(h, (-off) % HW, 1)                # tap[s] == h[s + off]
            acc = acc + tap * (wd[:, k:k + 1] * masks[t:t + 1, :])
        acc = jnp.clip(acc + bd, 0.0, 6.0)                     # bias + ReLU6

        if stride > 1:
            # Subsample in the flat lane-dense layout with a 0/1 selection
            # matmul instead of reshape + strided slice (both force relayouts).
            # TODO(synk): for large HW, accumulate taps directly at output
            # positions instead of using an HW x HWo selection matrix.
            acc = jnp.dot(acc, sel_ref[...], preferred_element_type=jnp.float32)

        # ---- conv3 (1x1) + folded bn3: MXU matmul (K = Ce), f32 accumulate ----
        out = jnp.dot(w3, acc, preferred_element_type=jnp.float32) + b3

        if add_residual:
            out = out + x_ref[nb]       # deferred re-read; Cin == Cout, stride == 1

        o_ref[nb] = out                 # lane-dense store (last dim = Ho*Wo)


def _pick_images_per_step(N):
    """Largest divisor of N that still leaves >= 2 grid steps (when N >= 2).

    v7x has 2 TensorCores and the grid's 'parallel' axis is the only cross-TC
    lever here, so we keep at least 2 steps.  On single-TC chips (v5e/v6e),
    passing images_per_step=N to collapse the grid to one step is strictly
    better (amortizes the ~0.35 us per-step pipeline overhead).
    """
    if N <= 1:
        return 1
    for nb in range(N // 2, 0, -1):
        if N % nb == 0:
            return nb
    return 1


def _border_masks(H, W):
    """(8, HW) f32 validity mask per off-centre tap, order matching _TAPS."""
    HW = H * W
    row = np.arange(HW, dtype=np.int64) // W
    col = np.arange(HW, dtype=np.int64) % W
    m = np.zeros((len(_TAPS), HW), np.float32)
    for t, (dh, dw) in enumerate(_TAPS):
        ok = (row + dh >= 0) & (row + dh <= H - 1) & (col + dw >= 0) & (col + dw <= W - 1)
        m[t] = ok.astype(np.float32)
    return jnp.asarray(m)


def _stride_select_matrix(H, W, stride):
    """(HW, HWo) 0/1 matrix selecting strided output positions in flat layout."""
    Ho = (H - 1) // stride + 1
    Wo = (W - 1) // stride + 1
    sel = np.zeros((H * W, Ho * Wo), np.float32)
    for ho in range(Ho):
        for wo in range(Wo):
            sel[(ho * stride) * W + wo * stride, ho * Wo + wo] = 1.0
    return jnp.asarray(sel)


def linear_bottleneck_pallas(x_nchw, p, *, stride, images_per_step=None):
    """x_nchw: (N, Cin, H, W) float32.  p: packed BN-folded params from fold_params."""
    N, Cin, H, W = x_nchw.shape
    Ce = p["pblk1"].shape[0]
    Cout = p["pblk3"].shape[0]
    HW = H * W
    Ho = (H - 1) // stride + 1
    Wo = (W - 1) // stride + 1
    HWo = Ho * Wo
    add_residual = (stride == 1 and Cin == Cout)

    NB = images_per_step if images_per_step is not None else _pick_images_per_step(N)
    assert N % NB == 0, "images_per_step must divide the batch"

    x_flat = x_nchw.reshape(N, Cin, HW)      # native NCHW, spatial flattened to lanes
    masks = _border_masks(H, W)

    kernel = functools.partial(
        _linear_bottleneck_kernel,
        H=H, W=W, Cin=Cin, Ce=Ce, Cout=Cout, NB=NB, stride=stride,
        add_residual=add_residual)

    in_specs = [
        pl.BlockSpec((NB, Cin, HW), lambda i: (i, 0, 0)),
        pl.BlockSpec((Ce, Cin + 11), lambda i: (0, 0)),
        pl.BlockSpec((Cout, Ce + 1), lambda i: (0, 0)),
        pl.BlockSpec((8, HW), lambda i: (0, 0)),
    ]
    args = [x_flat, p["pblk1"], p["pblk3"], masks]
    if stride > 1:
        in_specs.append(pl.BlockSpec((HW, HWo), lambda i: (0, 0)))
        args.append(_stride_select_matrix(H, W, stride))

    # Per-grid-step VMEM: double-buffered x (2*NB*Cin*HW*4B) + out
    # (2*NB*Cout*HWo*4B) + packed params/masks (<20 KB) + a few live (Ce, HW) f32
    # maps per image (~0.1 MiB here) — well under the 32 MiB scoped limit on all
    # of v5e/v6e/v7x at these shapes.
    # TODO(synk): for real MobileNetV2 layer sizes (e.g. 112x112, Ce>=144) tile the
    # HW axis into row blocks with a 1-row halo, sized against v7x's 64 MiB VMEM.
    out_flat = pl.pallas_call(
        kernel,
        out_shape=jax.ShapeDtypeStruct((N, Cout, HWo), jnp.float32),
        grid_spec=pltpu.PrefetchScalarGridSpec(
            num_scalar_prefetch=0,
            grid=(N // NB,),
            in_specs=in_specs,
            out_specs=pl.BlockSpec((NB, Cout, HWo), lambda i: (i, 0, 0)),
        ),
        compiler_params=pltpu.CompilerParams(
            dimension_semantics=("parallel",),
            vmem_limit_bytes=32 * 1024 * 1024),
    )(*args)

    return out_flat.reshape(N, Cout, Ho, Wo)


# ----------------------------------------------------------------------------
# Parameter construction (deterministic) + BN folding (exact, inference mode)
# ----------------------------------------------------------------------------
def make_params(key, Cin, Cout, expansion):
    Ce = Cin * expansion
    ks = jax.random.split(key, 18)
    u = lambda k, s: jax.random.uniform(k, s, jnp.float32, 0.5, 1.5)
    n = lambda k, s, sc=0.1: jax.random.normal(k, s, jnp.float32) * sc
    return dict(
        w1=n(ks[0], (Ce, Cin)), b1=n(ks[1], (Ce,)),
        g1=u(ks[2], (Ce,)), be1=n(ks[3], (Ce,)), m1=n(ks[4], (Ce,)), v1=u(ks[5], (Ce,)),
        wd=n(ks[6], (Ce, 3, 3)), bd=n(ks[7], (Ce,)),
        g2=u(ks[8], (Ce,)), be2=n(ks[9], (Ce,)), m2=n(ks[10], (Ce,)), v2=u(ks[11], (Ce,)),
        w3=n(ks[12], (Cout, Ce)), b3=n(ks[13], (Cout,)),
        g3=u(ks[14], (Cout,)), be3=n(ks[15], (Cout,)), m3=n(ks[16], (Cout,)), v3=u(ks[17], (Cout,)),
    )


def fold_bn_out(w, b, gamma, beta, mean, var, eps=1e-5):
    # out-channel is the FIRST axis of w (PyTorch orientation)
    s = gamma / jnp.sqrt(var + eps)
    w_f = w * s.reshape((-1,) + (1,) * (w.ndim - 1))
    b_f = b * s + (beta - s * mean)
    return w_f, b_f


def fold_params(raw):
    w1, b1 = fold_bn_out(raw["w1"], raw["b1"], raw["g1"], raw["be1"], raw["m1"], raw["v1"])
    wd, bd = fold_bn_out(raw["wd"], raw["bd"], raw["g2"], raw["be2"], raw["m2"], raw["v2"])
    w3, b3 = fold_bn_out(raw["w3"], raw["b3"], raw["g3"], raw["be3"], raw["m3"], raw["v3"])
    Ce, Cin = w1.shape
    Cout = w3.shape[0]
    # Consolidate the small per-channel tensors into two inputs (fewer prologue DMAs).
    pblk1 = jnp.concatenate(
        [w1, b1.reshape(Ce, 1), wd.reshape(Ce, 9), bd.reshape(Ce, 1)], axis=1)   # (Ce, Cin+11)
    pblk3 = jnp.concatenate([w3, b3.reshape(Cout, 1)], axis=1)                   # (Cout, Ce+1)
    return dict(pblk1=pblk1.astype(jnp.float32), pblk3=pblk3.astype(jnp.float32))


# ----------------------------------------------------------------------------
# Pure-JAX reference (lax.conv, NCHW), matching PyTorch eval-mode semantics
# ----------------------------------------------------------------------------
def reference_nchw(x, raw, stride, eps=1e-5):
    Cin = x.shape[1]
    Ce = raw["w1"].shape[0]
    Cout = raw["w3"].shape[0]
    dn = ("NCHW", "OIHW", "NCHW")
    hi = jax.lax.Precision.HIGHEST

    def bn(y, g, be, m, v):
        return ((y - m[None, :, None, None]) / jnp.sqrt(v[None, :, None, None] + eps)
                * g[None, :, None, None] + be[None, :, None, None])

    y = jax.lax.conv_general_dilated(x, raw["w1"][:, :, None, None], (1, 1), "VALID",
                                     dimension_numbers=dn, precision=hi)
    y = bn(y + raw["b1"][None, :, None, None], raw["g1"], raw["be1"], raw["m1"], raw["v1"])
    y = jax.lax.conv_general_dilated(y, raw["wd"][:, None, :, :], (stride, stride),
                                     ((1, 1), (1, 1)), dimension_numbers=dn,
                                     feature_group_count=Ce, precision=hi)
    y = bn(y + raw["bd"][None, :, None, None], raw["g2"], raw["be2"], raw["m2"], raw["v2"])
    y = jnp.clip(y, 0.0, 6.0)
    y = jax.lax.conv_general_dilated(y, raw["w3"][:, :, None, None], (1, 1), "VALID",
                                     dimension_numbers=dn, precision=hi)
    y = bn(y + raw["b3"][None, :, None, None], raw["g3"], raw["be3"], raw["m3"], raw["v3"])
    if stride == 1 and Cin == Cout:
        y = y + x
    return y


if __name__ == "__main__":
    # Small shapes consistent with the module: batch=2, channels=4, spatial=16,
    # expansion=6 (-> 24 expanded channels), stride=1 (residual path active).
    N, Cin, H, W = 2, 4, 16, 16
    expansion, Cout, stride = 6, 4, 1

    key = jax.random.PRNGKey(0)
    kx, kp = jax.random.split(key)
    x_nchw = jax.random.normal(kx, (N, Cin, H, W), jnp.float32)   # PyTorch layout

    raw = make_params(kp, Cin, Cout, expansion)
    folded = fold_params(raw)

    out = linear_bottleneck_pallas(x_nchw, folded, stride=stride)
    jax.block_until_ready(out)

    ref = reference_nchw(x_nchw, raw, stride)
    # Kernel is f32 on the VPU throughout; only conv3 uses the MXU (f32 path), so
    # error vs the f32 HIGHEST reference is tiny.  1e-2 tolerance leaves margin.
    np.testing.assert_allclose(np.asarray(out), np.asarray(ref),
                               rtol=1e-2, atol=1e-2)
    print("KERNEL_OK")
</pallas_src>

<mosaic_0001>
module attributes {stable_mosaic.version = 11 : i64} {
  func.func @_linear_bottleneck_kernel(%arg0: i32, %arg1: memref<1x4x256xf32, #tpu.memory_space<vmem>>, %arg2: memref<24x15xf32, #tpu.memory_space<vmem>>, %arg3: memref<4x25xf32, #tpu.memory_space<vmem>>, %arg4: memref<8x256xf32, #tpu.memory_space<vmem>>, %arg5: memref<1x4x256xf32, #tpu.memory_space<vmem>>) attributes {dimension_semantics = [#tpu.dimension_semantics<parallel>], iteration_bounds = array<i64: 2>, scalar_prefetch = 0 : i64, scratch_operands = 0 : i64, tpu.core_type = #tpu.core_type<tc>, window_params = [{transform_indices = @transform_0, window_bounds = array<i64: 1, 4, 256>}, {pipeline_mode = #tpu.pipeline_mode<synchronous>, transform_indices = @transform_1, window_bounds = array<i64: 24, 15>}, {pipeline_mode = #tpu.pipeline_mode<synchronous>, transform_indices = @transform_2, window_bounds = array<i64: 4, 25>}, {pipeline_mode = #tpu.pipeline_mode<synchronous>, transform_indices = @transform_3, window_bounds = array<i64: 8, 256>}, {transform_indices = @transform_4, window_bounds = array<i64: 1, 4, 256>}]} {
    %c0 = arith.constant 0 : index
    %c0_0 = arith.constant 0 : index
    %0 = vector.load %arg2[%c0, %c0_0] : memref<24x15xf32, #tpu.memory_space<vmem>>, vector<24x15xf32>
    %1 = vector.extract_strided_slice %0 {offsets = [0, 0], sizes = [24, 4], strides = [1, 1]} : vector<24x15xf32> to vector<24x4xf32>
    %2 = vector.extract_strided_slice %0 {offsets = [0, 4], sizes = [24, 1], strides = [1, 1]} : vector<24x15xf32> to vector<24x1xf32>
    %3 = vector.extract_strided_slice %0 {offsets = [0, 5], sizes = [24, 9], strides = [1, 1]} : vector<24x15xf32> to vector<24x9xf32>
    %4 = vector.extract_strided_slice %0 {offsets = [0, 14], sizes = [24, 1], strides = [1, 1]} : vector<24x15xf32> to vector<24x1xf32>
    %c0_1 = arith.constant 0 : index
    %c0_2 = arith.constant 0 : index
    %5 = vector.load %arg3[%c0_1, %c0_2] : memref<4x25xf32, #tpu.memory_space<vmem>>, vector<4x25xf32>
    %6 = vector.extract_strided_slice %5 {offsets = [0, 0], sizes = [4, 24], strides = [1, 1]} : vector<4x25xf32> to vector<4x24xf32>
    %7 = vector.extract_strided_slice %5 {offsets = [0, 24], sizes = [4, 1], strides = [1, 1]} : vector<4x25xf32> to vector<4x1xf32>
    %c0_3 = arith.constant 0 : index
    %c0_4 = arith.constant 0 : index
    %8 = vector.load %arg4[%c0_3, %c0_4] : memref<8x256xf32, #tpu.memory_space<vmem>>, vector<8x256xf32>
    %c0_5 = arith.constant 0 : index
    %c0_6 = arith.constant 0 : index
    %c0_7 = arith.constant 0 : index
    %9 = vector.load %arg1[%c0_5, %c0_6, %c0_7] : memref<1x4x256xf32, #tpu.memory_space<vmem>>, vector<1x4x256xf32>
    %10 = vector.shape_cast %9 : vector<1x4x256xf32> to vector<4x256xf32>
    %11 = vector.extract_strided_slice %1 {offsets = [0, 0], sizes = [24, 1], strides = [1, 1]} : vector<24x4xf32> to vector<24x1xf32>
    %12 = vector.extract_strided_slice %10 {offsets = [0, 0], sizes = [1, 256], strides = [1, 1]} : vector<4x256xf32> to vector<1x256xf32>
    %13 = vector.broadcast %11 : vector<24x1xf32> to vector<24x256xf32>
    %14 = vector.broadcast %12 : vector<1x256xf32> to vector<24x256xf32>
    %15 = arith.mulf %13, %14 : vector<24x256xf32>
    %16 = vector.extract_strided_slice %1 {offsets = [0, 1], sizes = [24, 1], strides = [1, 1]} : vector<24x4xf32> to vector<24x1xf32>
    %17 = vector.extract_strided_slice %10 {offsets = [1, 0], sizes = [1, 256], strides = [1, 1]} : vector<4x256xf32> to vector<1x256xf32>
    %18 = vector.broadcast %16 : vector<24x1xf32> to vector<24x256xf32>
    %19 = vector.broadcast %17 : vector<1x256xf32> to vector<24x256xf32>
    %20 = arith.mulf %18, %19 : vector<24x256xf32>
    %21 = arith.addf %15, %20 : vector<24x256xf32>
    %22 = vector.extract_strided_slice %1 {offsets = [0, 2], sizes = [24, 1], strides = [1, 1]} : vector<24x4xf32> to vector<24x1xf32>
    %23 = vector.extract_strided_slice %10 {offsets = [2, 0], sizes = [1, 256], strides = [1, 1]} : vector<4x256xf32> to vector<1x256xf32>
    %24 = vector.broadcast %22 : vector<24x1xf32> to vector<24x256xf32>
    %25 = vector.broadcast %23 : vector<1x256xf32> to vector<24x256xf32>
    %26 = arith.mulf %24, %25 : vector<24x256xf32>
    %27 = arith.addf %21, %26 : vector<24x256xf32>
    %28 = vector.extract_strided_slice %1 {offsets = [0, 3], sizes = [24, 1], strides = [1, 1]} : vector<24x4xf32> to vector<24x1xf32>
    %29 = vector.extract_strided_slice %10 {offsets = [3, 0], sizes = [1, 256], strides = [1, 1]} : vector<4x256xf32> to vector<1x256xf32>
    %30 = vector.broadcast %28 : vector<24x1xf32> to vector<24x256xf32>
    %31 = vector.broadcast %29 : vector<1x256xf32> to vector<24x256xf32>
    %32 = arith.mulf %30, %31 : vector<24x256xf32>
    %33 = arith.addf %27, %32 : vector<24x256xf32>
    %34 = vector.broadcast %2 : vector<24x1xf32> to vector<24x256xf32>
    %35 = arith.addf %33, %34 : vector<24x256xf32>
    %36 = vector.extract_strided_slice %3 {offsets = [0, 4], sizes = [24, 1], strides = [1, 1]} : vector<24x9xf32> to vector<24x1xf32>
    %37 = vector.broadcast %36 : vector<24x1xf32> to vector<24x256xf32>
    %38 = arith.mulf %35, %37 : vector<24x256xf32>
    %c17_i32 = arith.constant 17 : i32
    %39 = tpu.dynamic_rotate %35 by %c17_i32 dim 1 : vector<24x256xf32>, i32 -> vector<24x256xf32>
    %40 = vector.extract_strided_slice %3 {offsets = [0, 0], sizes = [24, 1], strides = [1, 1]} : vector<24x9xf32> to vector<24x1xf32>
    %41 = vector.extract_strided_slice %8 {offsets = [0, 0], sizes = [1, 256], strides = [1, 1]} : vector<8x256xf32> to vector<1x256xf32>
    %42 = vector.broadcast %40 : vector<24x1xf32> to vector<24x256xf32>
    %43 = vector.broadcast %41 : vector<1x256xf32> to vector<24x256xf32>
    %44 = arith.mulf %42, %43 : vector<24x256xf32>
    %45 = arith.mulf %39, %44 : vector<24x256xf32>
    %46 = arith.addf %38, %45 : vector<24x256xf32>
    %c16_i32 = arith.constant 16 : i32
    %47 = tpu.dynamic_rotate %35 by %c16_i32 dim 1 : vector<24x256xf32>, i32 -> vector<24x256xf32>
    %48 = vector.extract_strided_slice %3 {offsets = [0, 1], sizes = [24, 1], strides = [1, 1]} : vector<24x9xf32> to vector<24x1xf32>
    %49 = vector.extract_strided_slice %8 {offsets = [1, 0], sizes = [1, 256], strides = [1, 1]} : vector<8x256xf32> to vector<1x256xf32>
    %50 = vector.broadcast %48 : vector<24x1xf32> to vector<24x256xf32>
    %51 = vector.broadcast %49 : vector<1x256xf32> to vector<24x256xf32>
    %52 = arith.mulf %50, %51 : vector<24x256xf32>
    %53 = arith.mulf %47, %52 : vector<24x256xf32>
    %54 = arith.addf %46, %53 : vector<24x256xf32>
    %c15_i32 = arith.constant 15 : i32
    %55 = tpu.dynamic_rotate %35 by %c15_i32 dim 1 : vector<24x256xf32>, i32 -> vector<24x256xf32>
    %56 = vector.extract_strided_slice %3 {offsets = [0, 2], sizes = [24, 1], strides = [1, 1]} : vector<24x9xf32> to vector<24x1xf32>
    %57 = vector.extract_strided_slice %8 {offsets = [2, 0], sizes = [1, 256], strides = [1, 1]} : vector<8x256xf32> to vector<1x256xf32>
    %58 = vector.broadcast %56 : vector<24x1xf32> to vector<24x256xf32>
    %59 = vector.broadcast %57 : vector<1x256xf32> to vector<24x256xf32>
    %60 = arith.mulf %58, %59 : vector<24x256xf32>
    %61 = arith.mulf %55, %60 : vector<24x256xf32>
    %62 = arith.addf %54, %61 : vector<24x256xf32>
    %c1_i32 = arith.constant 1 : i32
    %63 = tpu.dynamic_rotate %35 by %c1_i32 dim 1 : vector<24x256xf32>, i32 -> vector<24x256xf32>
    %64 = vector.extract_strided_slice %3 {offsets = [0, 3], sizes = [24, 1], strides = [1, 1]} : vector<24x9xf32> to vector<24x1xf32>
    %65 = vector.extract_strided_slice %8 {offsets = [3, 0], sizes = [1, 256], strides = [1, 1]} : vector<8x256xf32> to vector<1x256xf32>
    %66 = vector.broadcast %64 : vector<24x1xf32> to vector<24x256xf32>
    %67 = vector.broadcast %65 : vector<1x256xf32> to vector<24x256xf32>
    %68 = arith.mulf %66, %67 : vector<24x256xf32>
    %69 = arith.mulf %63, %68 : vector<24x256xf32>
    %70 = arith.addf %62, %69 : vector<24x256xf32>
    %c255_i32 = arith.constant 255 : i32
    %71 = tpu.dynamic_rotate %35 by %c255_i32 dim 1 : vector<24x256xf32>, i32 -> vector<24x256xf32>
    %72 = vector.extract_strided_slice %3 {offsets = [0, 5], sizes = [24, 1], strides = [1, 1]} : vector<24x9xf32> to vector<24x1xf32>
    %73 = vector.extract_strided_slice %8 {offsets = [4, 0], sizes = [1, 256], strides = [1, 1]} : vector<8x256xf32> to vector<1x256xf32>
    %74 = vector.broadcast %72 : vector<24x1xf32> to vector<24x256xf32>
    %75 = vector.broadcast %73 : vector<1x256xf32> to vector<24x256xf32>
    %76 = arith.mulf %74, %75 : vector<24x256xf32>
    %77 = arith.mulf %71, %76 : vector<24x256xf32>
    %78 = arith.addf %70, %77 : vector<24x256xf32>
    %c241_i32 = arith.constant 241 : i32
    %79 = tpu.dynamic_rotate %35 by %c241_i32 dim 1 : vector<24x256xf32>, i32 -> vector<24x256xf32>
    %80 = vector.extract_strided_slice %3 {offsets = [0, 6], sizes = [24, 1], strides = [1, 1]} : vector<24x9xf32> to vector<24x1xf32>
    %81 = vector.extract_strided_slice %8 {offsets = [5, 0], sizes = [1, 256], strides = [1, 1]} : vector<8x256xf32> to vector<1x256xf32>
    %82 = vector.broadcast %80 : vector<24x1xf32> to vector<24x256xf32>
    %83 = vector.broadcast %81 : vector<1x256xf32> to vector<24x256xf32>
    %84 = arith.mulf %82, %83 : vector<24x256xf32>
    %85 = arith.mulf %79, %84 : vector<24x256xf32>
    %86 = arith.addf %78, %85 : vector<24x256xf32>
    %c240_i32 = arith.constant 240 : i32
    %87 = tpu.dynamic_rotate %35 by %c240_i32 dim 1 : vector<24x256xf32>, i32 -> vector<24x256xf32>
    %88 = vector.extract_strided_slice %3 {offsets = [0, 7], sizes = [24, 1], strides = [1, 1]} : vector<24x9xf32> to vector<24x1xf32>
    %89 = vector.extract_strided_slice %8 {offsets = [6, 0], sizes = [1, 256], strides = [1, 1]} : vector<8x256xf32> to vector<1x256xf32>
    %90 = vector.broadcast %88 : vector<24x1xf32> to vector<24x256xf32>
    %91 = vector.broadcast %89 : vector<1x256xf32> to vector<24x256xf32>
    %92 = arith.mulf %90, %91 : vector<24x256xf32>
    %93 = arith.mulf %87, %92 : vector<24x256xf32>
    %94 = arith.addf %86, %93 : vector<24x256xf32>
    %c239_i32 = arith.constant 239 : i32
    %95 = tpu.dynamic_rotate %35 by %c239_i32 dim 1 : vector<24x256xf32>, i32 -> vector<24x256xf32>
    %96 = vector.extract_strided_slice %3 {offsets = [0, 8], sizes = [24, 1], strides = [1, 1]} : vector<24x9xf32> to vector<24x1xf32>
    %97 = vector.extract_strided_slice %8 {offsets = [7, 0], sizes = [1, 256], strides = [1, 1]} : vector<8x256xf32> to vector<1x256xf32>
    %98 = vector.broadcast %96 : vector<24x1xf32> to vector<24x256xf32>
    %99 = vector.broadcast %97 : vector<1x256xf32> to vector<24x256xf32>
    %100 = arith.mulf %98, %99 : vector<24x256xf32>
    %101 = arith.mulf %95, %100 : vector<24x256xf32>
    %102 = arith.addf %94, %101 : vector<24x256xf32>
    %103 = vector.broadcast %4 : vector<24x1xf32> to vector<24x256xf32>
    %104 = arith.addf %102, %103 : vector<24x256xf32>
    %cst = arith.constant 0.000000e+00 : f32
    %cst_8 = arith.constant 6.000000e+00 : f32
    %105 = vector.broadcast %cst : f32 to vector<24x256xf32>
    %106 = arith.maximumf %105, %104 : vector<24x256xf32>
    %107 = vector.broadcast %cst_8 : f32 to vector<24x256xf32>
    %108 = arith.minimumf %107, %106 : vector<24x256xf32>
    %cst_9 = arith.constant dense<0.000000e+00> : vector<4x256xf32>
    %109 = tpu.matmul %6, %108, %cst_9 {dimension_numbers = #tpu.dot_dimension_numbers<[1], [0], [0], [1], [0, 0, 1, 1], [], []>} : vector<4x24xf32>, vector<24x256xf32>, vector<4x256xf32> -> vector<4x256xf32>
    %110 = vector.broadcast %7 : vector<4x1xf32> to vector<4x256xf32>
    %111 = arith.addf %109, %110 : vector<4x256xf32>
    %c0_10 = arith.constant 0 : index
    %c0_11 = arith.constant 0 : index
    %c0_12 = arith.constant 0 : index
    %112 = vector.load %arg1[%c0_10, %c0_11, %c0_12] : memref<1x4x256xf32, #tpu.memory_space<vmem>>, vector<1x4x256xf32>
    %113 = vector.shape_cast %112 : vector<1x4x256xf32> to vector<4x256xf32>
    %114 = arith.addf %111, %113 : vector<4x256xf32>
    %c0_13 = arith.constant 0 : index
    %c0_14 = arith.constant 0 : index
    %c0_15 = arith.constant 0 : index
    %115 = vector.load %arg5[%c0_13, %c0_14, %c0_15] : memref<1x4x256xf32, #tpu.memory_space<vmem>>, vector<1x4x256xf32>
    %116 = vector.shape_cast %115 : vector<1x4x256xf32> to vector<4x256xf32>
    %117 = vector.shape_cast %114 : vector<4x256xf32> to vector<1x4x256xf32>
    tpu.vector_store %arg5[%c0_13, %c0_14, %c0_15], %117 {strides = array<i32>} : memref<1x4x256xf32, #tpu.memory_space<vmem>>, vector<1x4x256xf32>,
    return
  }
  func.func @transform_0(%arg0: i32) -> (i32, i32, i32) {
    %c0_i32 = arith.constant 0 : i32
    %c0_i32_0 = arith.constant 0 : i32
    %c0_i32_1 = arith.constant 0 : i32
    return %arg0, %c0_i32, %c0_i32_0 : i32, i32, i32
  }
  func.func @transform_1(%arg0: i32) -> (i32, i32) {
    %c0_i32 = arith.constant 0 : i32
    %c0_i32_0 = arith.constant 0 : i32
    %c0_i32_1 = arith.constant 0 : i32
    return %c0_i32, %c0_i32_0 : i32, i32
  }
  func.func @transform_2(%arg0: i32) -> (i32, i32) {
    %c0_i32 = arith.constant 0 : i32
    %c0_i32_0 = arith.constant 0 : i32
    %c0_i32_1 = arith.constant 0 : i32
    return %c0_i32, %c0_i32_0 : i32, i32
  }
  func.func @transform_3(%arg0: i32) -> (i32, i32) {
    %c0_i32 = arith.constant 0 : i32
    %c0_i32_0 = arith.constant 0 : i32
    %c0_i32_1 = arith.constant 0 : i32
    return %c0_i32, %c0_i32_0 : i32, i32
  }
  func.func @transform_4(%arg0: i32) -> (i32, i32, i32) {
    %c0_i32 = arith.constant 0 : i32
    %c0_i32_0 = arith.constant 0 : i32
    %c0_i32_1 = arith.constant 0 : i32
    return %arg0, %c0_i32, %c0_i32_0 : i32, i32, i32
  }
}

</mosaic_0001>

<llo_original>
// kernel: tpu_custom_call.1
$region0: #{tpu_custom_call.1}
  #allocation0 [shape = 'u32[]', space=smem, size = 0x4, offset = 0x4, fixed_abs, tag = 'smem constant byte address 0x4 - core index']
  #allocation1 [shape = 'u32[144,128]{1,0:T(1,128)}', space=vmem, size = 0x12000, scoped, tag = 'internal scratch']
  %s0 = inlined_call_operand.vmem [shape: f32[2,4,256], index: 0, kind: input, shape index: {}]
  %s1 = inlined_call_operand.vmem [shape: f32[24,15], index: 1, kind: input, shape index: {}]
  %s2 = inlined_call_operand.vmem [shape: f32[4,25], index: 2, kind: input, shape index: {}]
  %s3 = inlined_call_operand.vmem [shape: f32[8,256], index: 3, kind: input, shape index: {}]
  %s4 = inlined_call_operand.hbm [shape: f32[2,4,256], index: 4, kind: output, shape index: {}]
  %s5 = sld [smem:[#allocation0]]
  $region49: #{tpu_custom_call.1} parent=0
    _
  %s7 = ssub.s32 1, %s5
  %s8 = scalar_select 0, %s7, %s5
  $region1: #{tpu_custom_call.1} parent=0
    #allocation2 [shape = 'u8[8192]{0}', space=vmem, size = 0x2000, scoped, tag = 'output window, operand 0']
    #allocation3 [shape = 's32[2]{0}', space=sflag, size = 0x8, scoped, tag = 'scoped memory for tpu_custom_call.1']
    %9 = vsyncpa [#allocation3], 0
    %s10 = scalar_lea.sflag [#allocation3], 1
    %11 = vsyncpa %s10, 0
    loop: start=0, step=1, limit=4
    $region2: #{tpu_custom_call.1} parent=1 // loop_pre_header
      _
    $region3: #{tpu_custom_call.1} parent=1 // loop_header
      %s13 = sphi 0, %s17
      %p14 = scmp.ge.s32.totalorder %s13, 4
      %s23 = sphi 0, %s25
      %s26 = sphi 0, %s23
      %s27 = sphi 0, %s26
      %s43 = sphi 0, %s27
      %s47 = sphi 0, %s47
      %s49 = sphi 0, %s47
      %s50 = sphi 0, %s49
      %s64 = sphi 0, %s50
      %s68 = sphi 0, %s68
      %s70 = sphi 0, %s68
      %s71 = sphi 0, %s70
      %s85 = sphi 0, %s71
      %s89 = sphi 0, %s89
      %s91 = sphi 0, %s89
      %s92 = sphi 0, %s91
      %s106 = sphi 0, %s92
      %s112 = sphi 0, %s114
      %s115 = sphi 0, %s112
      %s116 = sphi 0, %s115
      %s132 = sphi 0, %s116
    $region4: #{tpu_custom_call.1} parent=1 // loop_header_branch
      %16 = sbr.rel (%p14) target = $region8
    $region5: #{tpu_custom_call.1} parent=1 // loop_body
      %s18 = ssub.s32 %s13, 1
      %s19 = ssub.s32 %s13, 2
      %s20 = sadd.s32 %s13, 1
      %s21 = ssub.s32 %s13, %s20
      %p22 = scmp.eq.s32.totalorder %s21, 0
      %s24 = sadd.s32 %s23, 1
      %s25 = scalar_select %p22, %s23, %s24
      %p28 = pneg %p22
      %p29 = scmp.eq.s32.totalorder %s13, 1
      %p30 = por %p28, %p29
      %p31 = scmp.ne.s32.totalorder %s23, %s26
      %p32 = scmp.eq.s32.totalorder %s13, 0
      %p33 = por %p31, %p32
      %p34 = scmp.ne.s32.totalorder %s23, %s26
      %p35 = scmp.eq.s32.totalorder %s18, 1
      %p36 = por %p34, %p35
      %p37 = scmp.ne.s32.totalorder %s26, %s27
      %p38 = scmp.eq.s32.totalorder %s18, 0
      %p39 = por %p37, %p38
      %p40 = scmp.ne.s32.totalorder %s26, %s27
      %p41 = scmp.eq.s32.totalorder %s19, 1
      %p42 = por %p40, %p41
      %p44 = scmp.ne.s32.totalorder %s27, %s43
      %p45 = scmp.eq.s32.totalorder %s19, 0
      %p46 = por %p44, %p45
      %s48 = sadd.s32 %s47, 1
      %p51 = scmp.eq.s32.totalorder %s13, 1
      %p52 = scmp.ne.s32.totalorder %s47, %s49
      %p53 = scmp.eq.s32.totalorder %s13, 0
      %p54 = por %p52, %p53
      %p55 = scmp.ne.s32.totalorder %s47, %s49
      %p56 = scmp.eq.s32.totalorder %s18, 1
      %p57 = por %p55, %p56
      %p58 = scmp.ne.s32.totalorder %s49, %s50
      %p59 = scmp.eq.s32.totalorder %s18, 0
      %p60 = por %p58, %p59
      %p61 = scmp.ne.s32.totalorder %s49, %s50
      %p62 = scmp.eq.s32.totalorder %s19, 1
      %p63 = por %p61, %p62
      %p65 = scmp.ne.s32.totalorder %s50, %s64
      %p66 = scmp.eq.s32.totalorder %s19, 0
      %p67 = por %p65, %p66
      %s69 = sadd.s32 %s68, 1
      %p72 = scmp.eq.s32.totalorder %s13, 1
      %p73 = scmp.ne.s32.totalorder %s68, %s70
      %p74 = scmp.eq.s32.totalorder %s13, 0
      %p75 = por %p73, %p74
      %p76 = scmp.ne.s32.totalorder %s68, %s70
      %p77 = scmp.eq.s32.totalorder %s18, 1
      %p78 = por %p76, %p77
      %p79 = scmp.ne.s32.totalorder %s70, %s71
      %p80 = scmp.eq.s32.totalorder %s18, 0
      %p81 = por %p79, %p80
      %p82 = scmp.ne.s32.totalorder %s70, %s71
      %p83 = scmp.eq.s32.totalorder %s19, 1
      %p84 = por %p82, %p83
      %p86 = scmp.ne.s32.totalorder %s71, %s85
      %p87 = scmp.eq.s32.totalorder %s19, 0
      %p88 = por %p86, %p87
      %s90 = sadd.s32 %s89, 1
      %p93 = scmp.eq.s32.totalorder %s13, 1
      %p94 = scmp.ne.s32.totalorder %s89, %s91
      %p95 = scmp.eq.s32.totalorder %s13, 0
      %p96 = por %p94, %p95
      %p97 = scmp.ne.s32.totalorder %s89, %s91
      %p98 = scmp.eq.s32.totalorder %s18, 1
      %p99 = por %p97, %p98
      %p100 = scmp.ne.s32.totalorder %s91, %s92
      %p101 = scmp.eq.s32.totalorder %s18, 0
      %p102 = por %p100, %p101
      %p103 = scmp.ne.s32.totalorder %s91, %s92
      %p104 = scmp.eq.s32.totalorder %s19, 1
      %p105 = por %p103, %p104
      %p107 = scmp.ne.s32.totalorder %s92, %s106
      %p108 = scmp.eq.s32.totalorder %s19, 0
      %p109 = por %p107, %p108
      %s110 = ssub.s32 %s13, %s20
      %p111 = scmp.eq.s32.totalorder %s110, 0
      %s113 = sadd.s32 %s112, 1
      %s114 = scalar_select %p111, %s112, %s113
      %p117 = pneg %p111
      %p118 = scmp.eq.s32.totalorder %s13, 1
      %p119 = por %p117, %p118
      %p120 = scmp.ne.s32.totalorder %s112, %s115
      %p121 = scmp.eq.s32.totalorder %s13, 0
      %p122 = por %p120, %p121
      %p123 = scmp.ne.s32.totalorder %s112, %s115
      %p124 = scmp.eq.s32.totalorder %s18, 1
      %p125 = por %p123, %p124
      %p126 = scmp.ne.s32.totalorder %s115, %s116
      %p127 = scmp.eq.s32.totalorder %s18, 0
      %p128 = por %p126, %p127
      %p129 = scmp.ne.s32.totalorder %s115, %s116
      %p130 = scmp.eq.s32.totalorder %s19, 1
      %p131 = por %p129, %p130
      %p133 = scmp.ne.s32.totalorder %s116, %s132
      %p134 = scmp.eq.s32.totalorder %s19, 0
      %p135 = por %p133, %p134
      %p136 = scmp.le.s32.totalorder 1, %s13
      %p137 = scmp.lt.s32.totalorder %s13, 3
      %p138 = pnand %p136, %p137
      %p139 = pneg %p138
      // Predicated region
      $region9: #{tpu_custom_call.1} parent=5 // pred_check
        _
      $region10: #{tpu_custom_call.1} parent=5 // pred_check_branch
        %141 = sbr.rel (%p138) target = $region12
      $region11: #{tpu_custom_call.1} parent=5 // pred_region
        %s142 = ssub.s32 %s13, 1
        // Predicated region
        $region13: #{tpu_custom_call.1} parent=11 // pred_check
          %p143 = pneg %p60
        $region14: #{tpu_custom_call.1} parent=11 // pred_check_branch
          %145 = sbr.rel (%p143) target = $region16
        $region15: #{tpu_custom_call.1} parent=11 // pred_region
          _
        $region16: #{tpu_custom_call.1} parent=11 // pred_fallthru
          _
        // Predicated region
        $region17: #{tpu_custom_call.1} parent=11 // pred_check
          %p146 = pneg %p81
        $region18: #{tpu_custom_call.1} parent=11 // pred_check_branch
          %148 = sbr.rel (%p146) target = $region20
        $region19: #{tpu_custom_call.1} parent=11 // pred_region
          _
        $region20: #{tpu_custom_call.1} parent=11 // pred_fallthru
          _
        // Predicated region
        $region21: #{tpu_custom_call.1} parent=11 // pred_check
          %p149 = pneg %p102
        $region22: #{tpu_custom_call.1} parent=11 // pred_check_branch
          %151 = sbr.rel (%p149) target = $region24
        $region23: #{tpu_custom_call.1} parent=11 // pred_region
          _
        $region24: #{tpu_custom_call.1} parent=11 // pred_fallthru
          _
      $region12: #{tpu_custom_call.1} parent=5 // pred_fallthru
        _
      %p152 = scmp.lt.s32.totalorder %s13, 2
      // Predicated region
      $region25: #{tpu_custom_call.1} parent=5 // pred_check
        %p153 = pneg %p152
      $region26: #{tpu_custom_call.1} parent=5 // pred_check_branch
        %155 = sbr.rel (%p153) target = $region28
      $region27: #{tpu_custom_call.1} parent=5 // pred_region
        // Predicated region
        $region29: #{tpu_custom_call.1} parent=27 // pred_check
          %p156 = pneg %p33
        $region30: #{tpu_custom_call.1} parent=27 // pred_check_branch
          %158 = sbr.rel (%p156) target = $region32
        $region31: #{tpu_custom_call.1} parent=27 // pred_region
          %p159 = scmp.lt.s32.totalorder %s13, 1
          %s160 = scalar_select %p159, %s13, 1
          %s161 = smul.addr %s160, 2
          %s162 = smul.addr %s161, 4
          %s163 = scalar_lea.vmem %s0, %s162
        $region32: #{tpu_custom_call.1} parent=27 // pred_fallthru
          _
      $region28: #{tpu_custom_call.1} parent=5 // pred_fallthru
        _
      %p164 = scmp.le.s32.totalorder 1, %s13
      %p165 = scmp.lt.s32.totalorder %s13, 3
      %p166 = pnand %p164, %p165
      %p167 = pneg %p166
      // Predicated region
      $region33: #{tpu_custom_call.1} parent=5 // pred_check
        _
      $region34: #{tpu_custom_call.1} parent=5 // pred_check_branch
        %169 = sbr.rel (%p166) target = $region36
      $region35: #{tpu_custom_call.1} parent=5 // pred_region
        %s170 = ssub.s32 %s13, 1
        %p171 = scmp.lt.s32.totalorder %s18, 1
        %s172 = scalar_select %p171, %s18, 1
        %s173 = smul.addr %s172, 2
        %s174 = smul.addr %s173, 4
        %s175 = scalar_lea.vmem %s0, %s174
        %p176 = pneg %p39
        %p177 = pneg %p36
        %p178 = pneg %p60
        %p179 = pneg %p57
        %p180 = pneg %p81
        %p181 = pneg %p78
        %p182 = pneg %p102
        %p183 = pneg %p99
        %p184 = pneg %p128
        %p185 = pneg %p125
        %s186 = sand.u32 %s115, 1
        %s187 = scalar_lea.sflag [#allocation3], %s186
        %s188 = sand.u32 %s115, 1
        %s189 = smul.addr %s188, 8
        %s190 = scalar_lea.vmem [#allocation2], %s189
        %p191 = scmp.lt.s32.totalorder %s18, 1
        %s192 = scalar_select %p191, %s18, 1
        %s193 = smul.addr %s192, 2
        %s194 = smul.addr %s193, 4
        %s195 = scalar_lea.vmem %s0, %s194
        %v196 = vld [vmem:[%s1] sm:$0xff]
        %v197 = vld [vmem:[%s1 + $0x8] sm:$0xff]
        %v198 = vld [vmem:[%s1 + $0x10] sm:$0xff]
        %v199 = vld [vmem:[%s2] sm:$0xf]
        %v200 = vld [vmem:[%s3] sm:$0xff]
        %v201 = vld [vmem:[%s3 + $0x8] sm:$0xff]
        %v202 = vld [vmem:[%s195] sm:$0xff]
        %204 = vset.pattern.permute.xlu0 0
        %205 = vperm.xlu0 %204, %v196
        %v206 = vpop.permute.xlu0 %205
        %209 = vset.pattern.permute.xlu0 0
        %210 = vperm.xlu0 %209, %v197
        %v211 = vpop.permute.xlu0 %210
        %214 = vset.pattern.permute.xlu0 0
        %215 = vperm.xlu0 %214, %v198
        %v216 = vpop.permute.xlu0 %215
        %v219 = vlaneseq
        %v220 = vshrl.u32 %v219, 7
        %v221 = vsub.s32 0, %v220
        %v222 = vrot.slane %v202, %v221
        %v223 = vlaneseq
        %v224 = vshrl.u32 %v223, 7
        %v225 = vsub.s32 4, %v224
        %v226 = vrot.slane %v202, %v225
        %v229 = vlaneseq
        %v230 = vshrl.u32 %v229, 7
        %v231 = vsub.s32 0, %v230
        %v232 = vrot.slane %v222, %v231
        %v233 = vlaneseq
        %v234 = vshrl.u32 %v233, 7
        %v235 = vsub.s32 0, %v234
        %v236 = vrot.slane %v226, %v235
        %v237 = vmul.f32 %v206, %v232
        %v238 = vmul.f32 %v206, %v236
        %v239 = vmul.f32 %v211, %v232
        %v240 = vmul.f32 %v211, %v236
        %v241 = vmul.f32 %v216, %v232
        %v242 = vmul.f32 %v216, %v236
        %243 = vset.pattern.permute.xlu0 1
        %244 = vperm.xlu0 %243, %v196
        %v245 = vpop.permute.xlu0 %244
        %247 = vset.pattern.permute.xlu0 1
        %248 = vperm.xlu0 %247, %v197
        %v249 = vpop.permute.xlu0 %248
        %251 = vset.pattern.permute.xlu0 1
        %252 = vperm.xlu0 %251, %v198
        %v253 = vpop.permute.xlu0 %252
        %v255 = vlaneseq
        %v256 = vshrl.u32 %v255, 7
        %v257 = vsub.s32 1, %v256
        %v258 = vrot.slane %v202, %v257
        %v259 = vlaneseq
        %v260 = vshrl.u32 %v259, 7
        %v261 = vsub.s32 5, %v260
        %v262 = vrot.slane %v202, %v261
        %v265 = vlaneseq
        %v266 = vshrl.u32 %v265, 7
        %v267 = vsub.s32 1, %v266
        %v268 = vrot.slane %v258, %v267
        %v269 = vlaneseq
        %v270 = vshrl.u32 %v269, 7
        %v271 = vsub.s32 1, %v270
        %v272 = vrot.slane %v262, %v271
        %v273 = vmul.f32 %v245, %v268
        %v274 = vmul.f32 %v245, %v272
        %v275 = vmul.f32 %v249, %v268
        %v276 = vmul.f32 %v249, %v272
        %v277 = vmul.f32 %v253, %v268
        %v278 = vmul.f32 %v253, %v272
        %v279 = vadd.f32 %v237, %v273
        %v280 = vadd.f32 %v238, %v274
        %v281 = vadd.f32 %v239, %v275
        %v282 = vadd.f32 %v240, %v276
        %v283 = vadd.f32 %v241, %v277
        %v284 = vadd.f32 %v242, %v278
        %285 = vset.pattern.permute.xlu0 2
        %286 = vperm.xlu0 %285, %v196
        %v287 = vpop.permute.xlu0 %286
        %289 = vset.pattern.permute.xlu0 2
        %290 = vperm.xlu0 %289, %v197
        %v291 = vpop.permute.xlu0 %290
        %293 = vset.pattern.permute.xlu0 2
        %294 = vperm.xlu0 %293, %v198
        %v295 = vpop.permute.xlu0 %294
        %v297 = vlaneseq
        %v298 = vshrl.u32 %v297, 7
        %v299 = vsub.s32 2, %v298
        %v300 = vrot.slane %v202, %v299
        %v301 = vlaneseq
        %v302 = vshrl.u32 %v301, 7
        %v303 = vsub.s32 6, %v302
        %v304 = vrot.slane %v202, %v303
        %v307 = vlaneseq
        %v308 = vshrl.u32 %v307, 7
        %v309 = vsub.s32 2, %v308
        %v310 = vrot.slane %v300, %v309
        %v311 = vlaneseq
        %v312 = vshrl.u32 %v311, 7
        %v313 = vsub.s32 2, %v312
        %v314 = vrot.slane %v304, %v313
        %v315 = vmul.f32 %v287, %v310
        %v316 = vmul.f32 %v287, %v314
        %v317 = vmul.f32 %v291, %v310
        %v318 = vmul.f32 %v291, %v314
        %v319 = vmul.f32 %v295, %v310
        %v320 = vmul.f32 %v295, %v314
        %v321 = vadd.f32 %v279, %v315
        %v322 = vadd.f32 %v280, %v316
        %v323 = vadd.f32 %v281, %v317
        %v324 = vadd.f32 %v282, %v318
        %v325 = vadd.f32 %v283, %v319
        %v326 = vadd.f32 %v284, %v320
        %327 = vset.pattern.permute.xlu0 3
        %328 = vperm.xlu0 %327, %v196
        %v329 = vpop.permute.xlu0 %328
        %331 = vset.pattern.permute.xlu0 3
        %332 = vperm.xlu0 %331, %v197
        %v333 = vpop.permute.xlu0 %332
        %335 = vset.pattern.permute.xlu0 3
        %336 = vperm.xlu0 %335, %v198
        %v337 = vpop.permute.xlu0 %336
        %v339 = vlaneseq
        %v340 = vshrl.u32 %v339, 7
        %v341 = vsub.s32 3, %v340
        %v342 = vrot.slane %v202, %v341
        %v343 = vlaneseq
        %v344 = vshrl.u32 %v343, 7
        %v345 = vsub.s32 7, %v344
        %v346 = vrot.slane %v202, %v345
        %v349 = vlaneseq
        %v350 = vshrl.u32 %v349, 7
        %v351 = vsub.s32 3, %v350
        %v352 = vrot.slane %v342, %v351
        %v353 = vlaneseq
        %v354 = vshrl.u32 %v353, 7
        %v355 = vsub.s32 3, %v354
        %v356 = vrot.slane %v346, %v355
        %v357 = vmul.f32 %v329, %v352
        %v358 = vmul.f32 %v329, %v356
        %v359 = vmul.f32 %v333, %v352
        %v360 = vmul.f32 %v333, %v356
        %v361 = vmul.f32 %v337, %v352
        %v362 = vmul.f32 %v337, %v356
        %v363 = vadd.f32 %v321, %v357
        %v364 = vadd.f32 %v322, %v358
        %v365 = vadd.f32 %v323, %v359
        %v366 = vadd.f32 %v324, %v360
        %v367 = vadd.f32 %v325, %v361
        %v368 = vadd.f32 %v326, %v362
        %369 = vset.pattern.permute.xlu0 4
        %370 = vperm.xlu0 %369, %v196
        %v371 = vpop.permute.xlu0 %370
        %373 = vset.pattern.permute.xlu0 4
        %374 = vperm.xlu0 %373, %v197
        %v375 = vpop.permute.xlu0 %374
        %377 = vset.pattern.permute.xlu0 4
        %378 = vperm.xlu0 %377, %v198
        %v379 = vpop.permute.xlu0 %378
        %v381 = vadd.f32 %v363, %v371
        %v382 = vadd.f32 %v364, %v371
        %v383 = vadd.f32 %v365, %v375
        %v384 = vadd.f32 %v366, %v375
        %v385 = vadd.f32 %v367, %v379
        %v386 = vadd.f32 %v368, %v379
        %387 = vset.pattern.permute.xlu0 9
        %388 = vperm.xlu0 %387, %v196
        %v389 = vpop.permute.xlu0 %388
        %391 = vset.pattern.permute.xlu0 9
        %392 = vperm.xlu0 %391, %v197
        %v393 = vpop.permute.xlu0 %392
        %395 = vset.pattern.permute.xlu0 9
        %396 = vperm.xlu0 %395, %v198
        %v397 = vpop.permute.xlu0 %396
        %v399 = vmul.f32 %v381, %v389
        %v400 = vmul.f32 %v382, %v389
        %v401 = vmul.f32 %v383, %v393
        %v402 = vmul.f32 %v384, %v393
        %v403 = vmul.f32 %v385, %v397
        %v404 = vmul.f32 %v386, %v397
        %405 = vrot.lane.b32.xlu0 %v381, 17
        %v406 = vpop.permute.xlu0 %405
        %407 = vrot.lane.b32.xlu0 %v383, 17
        %v408 = vpop.permute.xlu0 %407
        %409 = vrot.lane.b32.xlu0 %v385, 17
        %v410 = vpop.permute.xlu0 %409
        %411 = vrot.lane.b32.xlu0 %v382, 17
        %v412 = vpop.permute.xlu0 %411
        %413 = vrot.lane.b32.xlu0 %v384, 17
        %v414 = vpop.permute.xlu0 %413
        %415 = vrot.lane.b32.xlu0 %v386, 17
        %v416 = vpop.permute.xlu0 %415
        %v417 = vlaneseq
        %v418 = vand.u32 %v417, 127
        %vm419 = vcmp.lt.s32.totalorder %v418, 17
        %v420 = vsel %vm419, %v406, %v412
        %v421 = vsel %vm419, %v408, %v414
        %v422 = vsel %vm419, %v410, %v416
        %v423 = vsel %vm419, %v412, %v406
        %v424 = vsel %vm419, %v414, %v408
        %v425 = vsel %vm419, %v416, %v410
        %426 = vset.pattern.permute.xlu0 5
        %427 = vperm.xlu0 %426, %v196
        %v428 = vpop.permute.xlu0 %427
        %430 = vset.pattern.permute.xlu0 5
        %431 = vperm.xlu0 %430, %v197
        %v432 = vpop.permute.xlu0 %431
        %434 = vset.pattern.permute.xlu0 5
        %435 = vperm.xlu0 %434, %v198
        %v436 = vpop.permute.xlu0 %435
        %v438 = vlaneseq
        %v439 = vshrl.u32 %v438, 7
        %v440 = vsub.s32 0, %v439
        %v441 = vrot.slane %v200, %v440
        %v442 = vlaneseq
        %v443 = vshrl.u32 %v442, 7
        %v444 = vsub.s32 0, %v443
        %v445 = vrot.slane %v201, %v444
        %v446 = vmul.f32 %v428, %v441
        %v447 = vmul.f32 %v428, %v445
        %v448 = vmul.f32 %v432, %v441
        %v449 = vmul.f32 %v432, %v445
        %v450 = vmul.f32 %v436, %v441
        %v451 = vmul.f32 %v436, %v445
        %v452 = vmul.f32 %v423, %v446
        %v453 = vmul.f32 %v420, %v447
        %v454 = vmul.f32 %v424, %v448
        %v455 = vmul.f32 %v421, %v449
        %v456 = vmul.f32 %v425, %v450
        %v457 = vmul.f32 %v422, %v451
        %v458 = vadd.f32 %v399, %v452
        %v459 = vadd.f32 %v400, %v453
        %v460 = vadd.f32 %v401, %v454
        %v461 = vadd.f32 %v402, %v455
        %v462 = vadd.f32 %v403, %v456
        %v463 = vadd.f32 %v404, %v457
        %464 = vrot.lane.b32.xlu0 %v381, 16
        %v465 = vpop.permute.xlu0 %464
        %466 = vrot.lane.b32.xlu0 %v383, 16
        %v467 = vpop.permute.xlu0 %466
        %468 = vrot.lane.b32.xlu0 %v385, 16
        %v469 = vpop.permute.xlu0 %468
        %470 = vrot.lane.b32.xlu0 %v382, 16
        %v471 = vpop.permute.xlu0 %470
        %472 = vrot.lane.b32.xlu0 %v384, 16
        %v473 = vpop.permute.xlu0 %472
        %474 = vrot.lane.b32.xlu0 %v386, 16
        %v475 = vpop.permute.xlu0 %474
        %vm476 = vcmp.lt.s32.totalorder %v418, 16
        %v477 = vsel %vm476, %v465, %v471
        %v478 = vsel %vm476, %v467, %v473
        %v479 = vsel %vm476, %v469, %v475
        %v480 = vsel %vm476, %v471, %v465
        %v481 = vsel %vm476, %v473, %v467
        %v482 = vsel %vm476, %v475, %v469
        %483 = vset.pattern.permute.xlu0 6
        %484 = vperm.xlu0 %483, %v196
        %v485 = vpop.permute.xlu0 %484
        %487 = vset.pattern.permute.xlu0 6
        %488 = vperm.xlu0 %487, %v197
        %v489 = vpop.permute.xlu0 %488
        %491 = vset.pattern.permute.xlu0 6
        %492 = vperm.xlu0 %491, %v198
        %v493 = vpop.permute.xlu0 %492
        %v495 = vlaneseq
        %v496 = vshrl.u32 %v495, 7
        %v497 = vsub.s32 1, %v496
        %v498 = vrot.slane %v200, %v497
        %v499 = vlaneseq
        %v500 = vshrl.u32 %v499, 7
        %v501 = vsub.s32 1, %v500
        %v502 = vrot.slane %v201, %v501
        %v503 = vmul.f32 %v485, %v498
        %v504 = vmul.f32 %v485, %v502
        %v505 = vmul.f32 %v489, %v498
        %v506 = vmul.f32 %v489, %v502
        %v507 = vmul.f32 %v493, %v498
        %v508 = vmul.f32 %v493, %v502
        %v509 = vmul.f32 %v480, %v503
        %v510 = vmul.f32 %v477, %v504
        %v511 = vmul.f32 %v481, %v505
        %v512 = vmul.f32 %v478, %v506
        %v513 = vmul.f32 %v482, %v507
        %v514 = vmul.f32 %v479, %v508
        %v515 = vadd.f32 %v458, %v509
        %v516 = vadd.f32 %v459, %v510
        %v517 = vadd.f32 %v460, %v511
        %v518 = vadd.f32 %v461, %v512
        %v519 = vadd.f32 %v462, %v513
        %v520 = vadd.f32 %v463, %v514
        %521 = vrot.lane.b32.xlu0 %v381, 15
        %v522 = vpop.permute.xlu0 %521
        %523 = vrot.lane.b32.xlu0 %v383, 15
        %v524 = vpop.permute.xlu0 %523
        %525 = vrot.lane.b32.xlu0 %v385, 15
        %v526 = vpop.permute.xlu0 %525
        %527 = vrot.lane.b32.xlu0 %v382, 15
        %v528 = vpop.permute.xlu0 %527
        %529 = vrot.lane.b32.xlu0 %v384, 15
        %v530 = vpop.permute.xlu0 %529
        %531 = vrot.lane.b32.xlu0 %v386, 15
        %v532 = vpop.permute.xlu0 %531
        %vm533 = vcmp.lt.s32.totalorder %v418, 15
        %v534 = vsel %vm533, %v522, %v528
        %v535 = vsel %vm533, %v524, %v530
        %v536 = vsel %vm533, %v526, %v532
        %v537 = vsel %vm533, %v528, %v522
        %v538 = vsel %vm533, %v530, %v524
        %v539 = vsel %vm533, %v532, %v526
        %540 = vset.pattern.permute.xlu0 7
        %541 = vperm.xlu0 %540, %v196
        %v542 = vpop.permute.xlu0 %541
        %544 = vset.pattern.permute.xlu0 7
        %545 = vperm.xlu0 %544, %v197
        %v546 = vpop.permute.xlu0 %545
        %548 = vset.pattern.permute.xlu0 7
        %549 = vperm.xlu0 %548, %v198
        %v550 = vpop.permute.xlu0 %549
        %v552 = vlaneseq
        %v553 = vshrl.u32 %v552, 7
        %v554 = vsub.s32 2, %v553
        %v555 = vrot.slane %v200, %v554
        %v556 = vlaneseq
        %v557 = vshrl.u32 %v556, 7
        %v558 = vsub.s32 2, %v557
        %v559 = vrot.slane %v201, %v558
        %v560 = vmul.f32 %v542, %v555
        %v561 = vmul.f32 %v542, %v559
        %v562 = vmul.f32 %v546, %v555
        %v563 = vmul.f32 %v546, %v559
        %v564 = vmul.f32 %v550, %v555
        %v565 = vmul.f32 %v550, %v559
        %v566 = vmul.f32 %v537, %v560
        %v567 = vmul.f32 %v534, %v561
        %v568 = vmul.f32 %v538, %v562
        %v569 = vmul.f32 %v535, %v563
        %v570 = vmul.f32 %v539, %v564
        %v571 = vmul.f32 %v536, %v565
        %v572 = vadd.f32 %v515, %v566
        %v573 = vadd.f32 %v516, %v567
        %v574 = vadd.f32 %v517, %v568
        %v575 = vadd.f32 %v518, %v569
        %v576 = vadd.f32 %v519, %v570
        %v577 = vadd.f32 %v520, %v571
        %578 = vrot.lane.b32.xlu0 %v381, 1
        %v579 = vpop.permute.xlu0 %578
        %580 = vrot.lane.b32.xlu0 %v383, 1
        %v581 = vpop.permute.xlu0 %580
        %582 = vrot.lane.b32.xlu0 %v385, 1
        %v583 = vpop.permute.xlu0 %582
        %584 = vrot.lane.b32.xlu0 %v382, 1
        %v585 = vpop.permute.xlu0 %584
        %586 = vrot.lane.b32.xlu0 %v384, 1
        %v587 = vpop.permute.xlu0 %586
        %588 = vrot.lane.b32.xlu0 %v386, 1
        %v589 = vpop.permute.xlu0 %588
        %vm590 = vcmp.lt.s32.totalorder %v418, 1
        %v591 = vsel %vm590, %v579, %v585
        %v592 = vsel %vm590, %v581, %v587
        %v593 = vsel %vm590, %v583, %v589
        %v594 = vsel %vm590, %v585, %v579
        %v595 = vsel %vm590, %v587, %v581
        %v596 = vsel %vm590, %v589, %v583
        %597 = vset.pattern.permute.xlu0 8
        %598 = vperm.xlu0 %597, %v196
        %v599 = vpop.permute.xlu0 %598
        %601 = vset.pattern.permute.xlu0 8
        %602 = vperm.xlu0 %601, %v197
        %v603 = vpop.permute.xlu0 %602
        %605 = vset.pattern.permute.xlu0 8
        %606 = vperm.xlu0 %605, %v198
        %v607 = vpop.permute.xlu0 %606
        %v609 = vlaneseq
        %v610 = vshrl.u32 %v609, 7
        %v611 = vsub.s32 3, %v610
        %v612 = vrot.slane %v200, %v611
        %v613 = vlaneseq
        %v614 = vshrl.u32 %v613, 7
        %v615 = vsub.s32 3, %v614
        %v616 = vrot.slane %v201, %v615
        %v617 = vmul.f32 %v599, %v612
        %v618 = vmul.f32 %v599, %v616
        %v619 = vmul.f32 %v603, %v612
        %v620 = vmul.f32 %v603, %v616
        %v621 = vmul.f32 %v607, %v612
        %v622 = vmul.f32 %v607, %v616
        %v623 = vmul.f32 %v594, %v617
        %v624 = vmul.f32 %v591, %v618
        %v625 = vmul.f32 %v595, %v619
        %v626 = vmul.f32 %v592, %v620
        %v627 = vmul.f32 %v596, %v621
        %v628 = vmul.f32 %v593, %v622
        %v629 = vadd.f32 %v572, %v623
        %v630 = vadd.f32 %v573, %v624
        %v631 = vadd.f32 %v574, %v625
        %v632 = vadd.f32 %v575, %v626
        %v633 = vadd.f32 %v576, %v627
        %v634 = vadd.f32 %v577, %v628
        %635 = vrot.lane.b32.xlu0 %v381, 127
        %v636 = vpop.permute.xlu0 %635
        %637 = vrot.lane.b32.xlu0 %v383, 127
        %v638 = vpop.permute.xlu0 %637
        %639 = vrot.lane.b32.xlu0 %v385, 127
        %v640 = vpop.permute.xlu0 %639
        %641 = vrot.lane.b32.xlu0 %v382, 127
        %v642 = vpop.permute.xlu0 %641
        %643 = vrot.lane.b32.xlu0 %v384, 127
        %v644 = vpop.permute.xlu0 %643
        %645 = vrot.lane.b32.xlu0 %v386, 127
        %v646 = vpop.permute.xlu0 %645
        %vm647 = vcmp.lt.s32.totalorder %v418, 127
        %v648 = vsel %vm647, %v636, %v642
        %v649 = vsel %vm647, %v638, %v644
        %v650 = vsel %vm647, %v640, %v646
        %v651 = vsel %vm647, %v642, %v636
        %v652 = vsel %vm647, %v644, %v638
        %v653 = vsel %vm647, %v646, %v640
        %654 = vset.pattern.permute.xlu0 10
        %655 = vperm.xlu0 %654, %v196
        %v656 = vpop.permute.xlu0 %655
        %658 = vset.pattern.permute.xlu0 10
        %659 = vperm.xlu0 %658, %v197
        %v660 = vpop.permute.xlu0 %659
        %662 = vset.pattern.permute.xlu0 10
        %663 = vperm.xlu0 %662, %v198
        %v664 = vpop.permute.xlu0 %663
        %v666 = vlaneseq
        %v667 = vshrl.u32 %v666, 7
        %v668 = vsub.s32 4, %v667
        %v669 = vrot.slane %v200, %v668
        %v670 = vlaneseq
        %v671 = vshrl.u32 %v670, 7
        %v672 = vsub.s32 4, %v671
        %v673 = vrot.slane %v201, %v672
        %v674 = vmul.f32 %v656, %v669
        %v675 = vmul.f32 %v656, %v673
        %v676 = vmul.f32 %v660, %v669
        %v677 = vmul.f32 %v660, %v673
        %v678 = vmul.f32 %v664, %v669
        %v679 = vmul.f32 %v664, %v673
        %v680 = vmul.f32 %v648, %v674
        %v681 = vmul.f32 %v651, %v675
        %v682 = vmul.f32 %v649, %v676
        %v683 = vmul.f32 %v652, %v677
        %v684 = vmul.f32 %v650, %v678
        %v685 = vmul.f32 %v653, %v679
        %v686 = vadd.f32 %v629, %v680
        %v687 = vadd.f32 %v630, %v681
        %v688 = vadd.f32 %v631, %v682
        %v689 = vadd.f32 %v632, %v683
        %v690 = vadd.f32 %v633, %v684
        %v691 = vadd.f32 %v634, %v685
        %692 = vrot.lane.b32.xlu0 %v381, 113
        %v693 = vpop.permute.xlu0 %692
        %694 = vrot.lane.b32.xlu0 %v383, 113
        %v695 = vpop.permute.xlu0 %694
        %696 = vrot.lane.b32.xlu0 %v385, 113
        %v697 = vpop.permute.xlu0 %696
        %698 = vrot.lane.b32.xlu0 %v382, 113
        %v699 = vpop.permute.xlu0 %698
        %700 = vrot.lane.b32.xlu0 %v384, 113
        %v701 = vpop.permute.xlu0 %700
        %702 = vrot.lane.b32.xlu0 %v386, 113
        %v703 = vpop.permute.xlu0 %702
        %vm704 = vcmp.lt.s32.totalorder %v418, 113
        %v705 = vsel %vm704, %v693, %v699
        %v706 = vsel %vm704, %v695, %v701
        %v707 = vsel %vm704, %v697, %v703
        %v708 = vsel %vm704, %v699, %v693
        %v709 = vsel %vm704, %v701, %v695
        %v710 = vsel %vm704, %v703, %v697
        %711 = vset.pattern.permute.xlu0 11
        %712 = vperm.xlu0 %711, %v196
        %v713 = vpop.permute.xlu0 %712
        %715 = vset.pattern.permute.xlu0 11
        %716 = vperm.xlu0 %715, %v197
        %v717 = vpop.permute.xlu0 %716
        %719 = vset.pattern.permute.xlu0 11
        %720 = vperm.xlu0 %719, %v198
        %v721 = vpop.permute.xlu0 %720
        %v723 = vlaneseq
        %v724 = vshrl.u32 %v723, 7
        %v725 = vsub.s32 5, %v724
        %v726 = vrot.slane %v200, %v725
        %v727 = vlaneseq
        %v728 = vshrl.u32 %v727, 7
        %v729 = vsub.s32 5, %v728
        %v730 = vrot.slane %v201, %v729
        %v731 = vmul.f32 %v713, %v726
        %v732 = vmul.f32 %v713, %v730
        %v733 = vmul.f32 %v717, %v726
        %v734 = vmul.f32 %v717, %v730
        %v735 = vmul.f32 %v721, %v726
        %v736 = vmul.f32 %v721, %v730
        %v737 = vmul.f32 %v705, %v731
        %v738 = vmul.f32 %v708, %v732
        %v739 = vmul.f32 %v706, %v733
        %v740 = vmul.f32 %v709, %v734
        %v741 = vmul.f32 %v707, %v735
        %v742 = vmul.f32 %v710, %v736
        %v743 = vadd.f32 %v686, %v737
        %v744 = vadd.f32 %v687, %v738
        %v745 = vadd.f32 %v688, %v739
        %v746 = vadd.f32 %v689, %v740
        %v747 = vadd.f32 %v690, %v741
        %v748 = vadd.f32 %v691, %v742
        %749 = vrot.lane.b32.xlu0 %v381, 112
        %v750 = vpop.permute.xlu0 %749
        %751 = vrot.lane.b32.xlu0 %v383, 112
        %v752 = vpop.permute.xlu0 %751
        %753 = vrot.lane.b32.xlu0 %v385, 112
        %v754 = vpop.permute.xlu0 %753
        %755 = vrot.lane.b32.xlu0 %v382, 112
        %v756 = vpop.permute.xlu0 %755
        %757 = vrot.lane.b32.xlu0 %v384, 112
        %v758 = vpop.permute.xlu0 %757
        %759 = vrot.lane.b32.xlu0 %v386, 112
        %v760 = vpop.permute.xlu0 %759
        %vm761 = vcmp.lt.s32.totalorder %v418, 112
        %v762 = vsel %vm761, %v750, %v756
        %v763 = vsel %vm761, %v752, %v758
        %v764 = vsel %vm761, %v754, %v760
        %v765 = vsel %vm761, %v756, %v750
        %v766 = vsel %vm761, %v758, %v752
        %v767 = vsel %vm761, %v760, %v754
        %768 = vset.pattern.permute.xlu0 12
        %769 = vperm.xlu0 %768, %v196
        %v770 = vpop.permute.xlu0 %769
        %772 = vset.pattern.permute.xlu0 12
        %773 = vperm.xlu0 %772, %v197
        %v774 = vpop.permute.xlu0 %773
        %776 = vset.pattern.permute.xlu0 12
        %777 = vperm.xlu0 %776, %v198
        %v778 = vpop.permute.xlu0 %777
        %v780 = vlaneseq
        %v781 = vshrl.u32 %v780, 7
        %v782 = vsub.s32 6, %v781
        %v783 = vrot.slane %v200, %v782
        %v784 = vlaneseq
        %v785 = vshrl.u32 %v784, 7
        %v786 = vsub.s32 6, %v785
        %v787 = vrot.slane %v201, %v786
        %v788 = vmul.f32 %v770, %v783
        %v789 = vmul.f32 %v770, %v787
        %v790 = vmul.f32 %v774, %v783
        %v791 = vmul.f32 %v774, %v787
        %v792 = vmul.f32 %v778, %v783
        %v793 = vmul.f32 %v778, %v787
        %v794 = vmul.f32 %v762, %v788
        %v795 = vmul.f32 %v765, %v789
        %v796 = vmul.f32 %v763, %v790
        %v797 = vmul.f32 %v766, %v791
        %v798 = vmul.f32 %v764, %v792
        %v799 = vmul.f32 %v767, %v793
        %v800 = vadd.f32 %v743, %v794
        %v801 = vadd.f32 %v744, %v795
        %v802 = vadd.f32 %v745, %v796
        %v803 = vadd.f32 %v746, %v797
        %v804 = vadd.f32 %v747, %v798
        %v805 = vadd.f32 %v748, %v799
        %806 = vrot.lane.b32.xlu0 %v381, 111
        %v807 = vpop.permute.xlu0 %806
        %808 = vrot.lane.b32.xlu0 %v383, 111
        %v809 = vpop.permute.xlu0 %808
        %810 = vrot.lane.b32.xlu0 %v385, 111
        %v811 = vpop.permute.xlu0 %810
        %812 = vrot.lane.b32.xlu0 %v382, 111
        %v813 = vpop.permute.xlu0 %812
        %814 = vrot.lane.b32.xlu0 %v384, 111
        %v815 = vpop.permute.xlu0 %814
        %816 = vrot.lane.b32.xlu0 %v386, 111
        %v817 = vpop.permute.xlu0 %816
        %vm818 = vcmp.lt.s32.totalorder %v418, 111
        %v819 = vsel %vm818, %v807, %v813
        %v820 = vsel %vm818, %v809, %v815
        %v821 = vsel %vm818, %v811, %v817
        %v822 = vsel %vm818, %v813, %v807
        %v823 = vsel %vm818, %v815, %v809
        %v824 = vsel %vm818, %v817, %v811
        %825 = vset.pattern.permute.xlu0 13
        %826 = vperm.xlu0 %825, %v196
        %v827 = vpop.permute.xlu0 %826
        %829 = vset.pattern.permute.xlu0 13
        %830 = vperm.xlu0 %829, %v197
        %v831 = vpop.permute.xlu0 %830
        %833 = vset.pattern.permute.xlu0 13
        %834 = vperm.xlu0 %833, %v198
        %v835 = vpop.permute.xlu0 %834
        %v837 = vlaneseq
        %v838 = vshrl.u32 %v837, 7
        %v839 = vsub.s32 7, %v838
        %v840 = vrot.slane %v200, %v839
        %v841 = vlaneseq
        %v842 = vshrl.u32 %v841, 7
        %v843 = vsub.s32 7, %v842
        %v844 = vrot.slane %v201, %v843
        %v845 = vmul.f32 %v827, %v840
        %v846 = vmul.f32 %v827, %v844
        %v847 = vmul.f32 %v831, %v840
        %v848 = vmul.f32 %v831, %v844
        %v849 = vmul.f32 %v835, %v840
        %v850 = vmul.f32 %v835, %v844
        %v851 = vmul.f32 %v819, %v845
        %v852 = vmul.f32 %v822, %v846
        %v853 = vmul.f32 %v820, %v847
        %v854 = vmul.f32 %v823, %v848
        %v855 = vmul.f32 %v821, %v849
        %v856 = vmul.f32 %v824, %v850
        %v857 = vadd.f32 %v800, %v851
        %v858 = vadd.f32 %v801, %v852
        %v859 = vadd.f32 %v802, %v853
        %v860 = vadd.f32 %v803, %v854
        %v861 = vadd.f32 %v804, %v855
        %v862 = vadd.f32 %v805, %v856
        %863 = vset.pattern.permute.xlu0 14
        %864 = vperm.xlu0 %863, %v196
        %v865 = vpop.permute.xlu0 %864
        %867 = vset.pattern.permute.xlu0 14
        %868 = vperm.xlu0 %867, %v197
        %v869 = vpop.permute.xlu0 %868
        %871 = vset.pattern.permute.xlu0 14
        %872 = vperm.xlu0 %871, %v198
        %v873 = vpop.permute.xlu0 %872
        %v875 = vadd.f32 %v857, %v865
        %v876 = vadd.f32 %v858, %v865
        %v877 = vadd.f32 %v859, %v869
        %v878 = vadd.f32 %v860, %v869
        %v879 = vadd.f32 %v861, %v873
        %v880 = vadd.f32 %v862, %v873
        %v881 = vmax.f32 %v875, 0.0
        %v882 = vmax.f32 %v876, 0.0
        %v883 = vmax.f32 %v877, 0.0
        %v884 = vmax.f32 %v878, 0.0
        %v885 = vmax.f32 %v879, 0.0
        %v886 = vmax.f32 %v880, 0.0
        %v887 = vmin.f32 %v881, 6.0
        %v888 = vmin.f32 %v882, 6.0
        %v889 = vmin.f32 %v883, 6.0
        %v890 = vmin.f32 %v884, 6.0
        %v891 = vmin.f32 %v885, 6.0
        %v892 = vmin.f32 %v886, 6.0
        %894 = vset.pattern.permute.xlu0 24
        %895 = vperm.xlu0 %894, %v199
        %v896 = vpop.permute.xlu0 %895
        %vm898 = vcmask 195584
        %v899 = vsel %vm898, %v199, 0
        %901 = vmatprep.subr.mxu0 %v888
        %902 = vmatpush1.msra.mxu0 %v887
        %903 = vmatprep.subr.mxu0 %v890
        %904 = vmatpush1.msra.mxu0 %v889
        %905 = vmatprep.subr.mxu0 %v892
        %906 = vmatpush1.msra.mxu0 %v891
        %907 = vmatprep.subr.mxu0 0.0
        %908 = vmatpush1.msra.mxu0 0.0
        %909 = vmatprep.subr.mxu0 0.0
        %910 = vmatpush1.msra.mxu0 0.0
        %911 = vmatprep.subr.mxu0 0.0
        %912 = vmatpush1.msra.mxu0 0.0
        %913 = vmatprep.subr.mxu0 0.0
        %914 = vmatpush1.msra.mxu0 0.0
        %915 = vmatprep.subr.mxu0 0.0
        %916 = vmatpush1.msra.mxu0 0.0
        %917 = vmatprep.subr.mxu0 0.0
        %918 = vmatpush1.msra.mxu0 0.0
        %919 = vmatprep.subr.mxu0 0.0
        %920 = vmatpush1.msra.mxu0 0.0
        %921 = vmatprep.subr.mxu0 0.0
        %922 = vmatpush1.msra.mxu0 0.0
        %923 = vmatprep.subr.mxu0 0.0
        %924 = vmatpush1.msra.mxu0 0.0
        %925 = vmatprep.subr.mxu0 0.0
        %926 = vmatpush1.msra.mxu0 0.0
        %927 = vmatprep.subr.mxu0 0.0
        %928 = vmatpush1.msra.mxu0 0.0
        %929 = vmatprep.subr.mxu0 0.0
        %930 = vmatpush1.msra.mxu0 0.0
        %931 = vmatprep.subr.mxu0 0.0
        %932 = vmatpush1.msra.mxu0 0.0
        %933 = vmatprep.subr.mxu0 0.0
        %934 = vmatpush1.msra.mxu0 0.0
        %935 = vmatprep.subr.mxu0 0.0
        %936 = vmatpush1.msra.mxu0 0.0
        %937 = vmatprep.subr.mxu0 0.0
        %938 = vmatpush1.msra.mxu0 0.0
        %939 = vmatprep.subr.mxu0 0.0
        %940 = vmatpush1.msra.mxu0 0.0
        %941 = vmatprep.subr.mxu0 0.0
        %942 = vmatpush1.msra.mxu0 0.0
        %943 = vmatprep.subr.mxu0 0.0
        %944 = vmatpush1.msra.mxu0 0.0
        %945 = vmatprep.subr.mxu0 0.0
        %946 = vmatpush1.msra.mxu0 0.0
        %947 = vmatprep.subr.mxu0 0.0
        %948 = vmatpush1.msra.mxu0 0.0
        %949 = vmatprep.subr.mxu0 0.0
        %950 = vmatpush1.msra.mxu0 0.0
        %951 = vmatprep.subr.mxu0 0.0
        %952 = vmatpush1.msra.mxu0 0.0
        %953 = vmatprep.subr.mxu0 0.0
        %954 = vmatpush1.msra.mxu0 0.0
        %955 = vmatprep.subr.mxu0 0.0
        %956 = vmatpush1.msra.mxu0 0.0
        %957 = vmatprep.subr.mxu0 0.0
        %958 = vmatpush1.msra.mxu0 0.0
        %959 = vmatprep.subr.mxu0 0.0
        %960 = vmatpush1.msra.mxu0 0.0
        %961 = vmatprep.subr.mxu0 0.0
        %962 = vmatpush1.msra.mxu0 0.0
        %963 = vmatprep.subr.mxu0 0.0
        %964 = vmatpush1.msra.mxu0 0.0
        %965 = vmatprep.mubr.f32.mxu0 0.0
        %966 = vmatmul.mubr.f32.gmra.mrb[0].mxu0 %v899
        %v967 = vpop.f32.mrb[0].mxu0
        %v968 = vadd.f32 %v896, %v967
        %v969 = vpop.f32.mrb[0].mxu0
        %v970 = vadd.f32 %v896, %v969
        %971 = vdwg.mxu0
        %v972 = vcombine.high %v202, %v202
        %v974 = vadd.f32 %v968, %v202
        %v975 = vadd.f32 %v970, %v972
        %v978 = vcombine.low %v974, %v975
        %980 = vst [vmem:[%s190] sm:$0xff] %v978
        %s981 = sand.u32 %s115, 1
        %s982 = scalar_lea.sflag [#allocation3], %s981
        %s983 = sand.u32 %s115, 1
        %s984 = smul.addr %s983, 8
        %s985 = scalar_lea.vmem [#allocation2], %s984
        // Predicated region
        $region37: #{tpu_custom_call.1} parent=35 // pred_check
          %p986 = pneg %p125
        $region38: #{tpu_custom_call.1} parent=35 // pred_check_branch
          %988 = sbr.rel (%p986) target = $region40
        $region39: #{tpu_custom_call.1} parent=35 // pred_region
          %s990 = ssub.s32 128, 128
          %991 = vsyncadd %s982, %s990
          %s992 = smul.addr %s18, 2
          %s993 = smul.addr %s992, 64
          %s994 = scalar_lea.hbm %s4, %s993
          %s996 = sshll.u32 %s985, 4
          %s997 = int_to_ptr.vmem [resolvable:$true] %s996
          %999 = dma.vmem_to_hbm [thread:$0]  %s997, 128, %s994, %s982
        $region40: #{tpu_custom_call.1} parent=35 // pred_fallthru
          _
      $region36: #{tpu_custom_call.1} parent=5 // pred_fallthru
        _
      %p1000 = scmp.le.s32.totalorder 2, %s13
      // Predicated region
      $region41: #{tpu_custom_call.1} parent=5 // pred_check
        %p1001 = pneg %p1000
      $region42: #{tpu_custom_call.1} parent=5 // pred_check_branch
        %1003 = sbr.rel (%p1001) target = $region44
      $region43: #{tpu_custom_call.1} parent=5 // pred_region
        %s1004 = ssub.s32 %s13, 2
        // Predicated region
        $region45: #{tpu_custom_call.1} parent=43 // pred_check
          %p1005 = pneg %p131
        $region46: #{tpu_custom_call.1} parent=43 // pred_check_branch
          %1007 = sbr.rel (%p1005) target = $region48
        $region47: #{tpu_custom_call.1} parent=43 // pred_region
          %s1008 = sand.u32 %s116, 1
          %s1009 = scalar_lea.sflag [#allocation3], %s1008
          %s1010 = sand.u32 %s116, 1
          %s1011 = smul.addr %s1010, 8
          %s1012 = scalar_lea.vmem [#allocation2], %s1011
          %1013 = dma.done %s1009, 128
        $region48: #{tpu_custom_call.1} parent=43 // pred_fallthru
          _
      $region44: #{tpu_custom_call.1} parent=5 // pred_fallthru
        _
    $region6: #{tpu_custom_call.1} parent=1 // loop_footer
      %s17 = sadd.s32 1, %s13
    $region7: #{tpu_custom_call.1} parent=1 // loop_footer_branch
      %12 = sbr.rel target = $region3
    $region8: #{tpu_custom_call.1} parent=1 // loop_exit
      _
    %1014 = vsyncpa [#allocation3], 1
    %s1015 = scalar_lea.sflag [#allocation3], 1
    %1016 = vsyncpa %s1015, 1

</llo_original>
